<compile_context>
chip_gen: v6e
topology: v6e:2x2x1
jax: 0.10.0
libtpu: 0.0.40
codegen_flags: <defaults>
</compile_context>

<pallas_src>
import functools

import jax
import jax.numpy as jnp
import numpy as np
from jax import lax
from jax.experimental import pallas as pl
from jax.experimental.pallas import tpu as pltpu


# ---------------------------- Pallas kernel ----------------------------

def _sa_kernel(x_ref, prm_ref, o_ref, *, inv_hw, eps, hw):
    """Fused SA-layer body for one (batch, k-band) tile.

    x_ref:   (2, TK, HW) f32 — x[g, k, :] is the plane of input channel g*half + k.
    prm_ref: (2, TK, 8)  f32 — per-(g, k) params:
             col 0 = cweight, col 1 = cbias                      (zero on x1 rows)
             col 2 = sweight*gn_weight, col 3 = sweight*gn_bias + sbias  (zero on x0 rows)
    o_ref:   (TK, 2*HW) f32 — gated output; lanes [0,HW) hold g=0, lanes [HW,2HW) hold g=1.
             Reshaped on the host to (B, C, H, W), this ordering IS channel_shuffle(·, 2).
    """
    x = x_ref[...]                                             # (2, TK, HW)
    p = prm_ref[...]                                           # (2, TK, 8)
    cw, cb = p[..., 0:1], p[..., 1:2]
    aw, ab = p[..., 2:3], p[..., 3:4]

    # Per-plane statistics (mean for avg-pool gate, mean/var for GroupNorm).
    s1 = jnp.sum(x, axis=-1, keepdims=True) * inv_hw           # E[x]
    s2 = jnp.sum(x * x, axis=-1, keepdims=True) * inv_hw       # E[x^2]
    var = jnp.maximum(s2 - s1 * s1, 0.0)                       # biased, like GroupNorm
    rstd = lax.rsqrt(var + eps)                                 # EUP, ~free slot

    # Branch-free unified gate argument (cross-branch params zeroed on host):
    #   x0 rows: arg = cweight*mean + cbias
    #   x1 rows: arg = sweight*(gn_w*(x-mean)*rstd + gn_b) + sbias
    a = aw * rstd                                               # per-row slope
    beta = (ab + cb) + (cw - a) * s1                            # per-row offset
    y = x * (1.0 / (1.0 + jnp.exp(-(a * x + beta))))            # sigmoid gate * x

    # Fused channel_shuffle: interleave the two halves on the lane axis.
    o_ref[:, 0:hw] = y[0]
    o_ref[:, hw:2 * hw] = y[1]


# ---------------------------- host-side helpers ----------------------------

def _row_params(p, c, groups):
    """Pack per-channel gate parameters into a (2, C//2, 8) f32 array matching the
    kernel's (g, k) row layout (input channel = g*(C//2) + k)."""
    cg = c // groups              # channels per group
    hg = cg // 2                  # channels per half-group (= GN num_channels)
    cw = p["cweight"].reshape((hg,))
    cb = p["cbias"].reshape((hg,))
    sw = p["sweight"].reshape((hg,))
    sb = p["sbias"].reshape((hg,))
    gw = p["gn_weight"].reshape((hg,))
    gb = p["gn_bias"].reshape((hg,))

    z = jnp.zeros((hg,), jnp.float32)
    # Within one group of cg channels: first half -> x0 branch, second half -> x1 branch.
    col_cw = jnp.concatenate([cw, z])
    col_cb = jnp.concatenate([cb, z])
    col_aw = jnp.concatenate([z, sw * gw])
    col_ab = jnp.concatenate([z, sw * gb + sb])
    pad = jnp.zeros((cg,), jnp.float32)
    cols = jnp.stack([col_cw, col_cb, col_aw, col_ab, pad, pad, pad, pad], axis=1)  # (cg, 8)
    full = jnp.tile(cols, (groups, 1))                # (C, 8), indexed by input channel
    return full.reshape(2, c // 2, 8).astype(jnp.float32)


def sa_layer_forward(x_nchw, params, groups, *, block_k=None):
    """Forward pass of sa_layer.  x_nchw: (B, C, H, W) float. Returns (B, C, H, W)."""
    x = x_nchw.astype(jnp.float32)
    b, c, h, w = x.shape
    assert c % (2 * groups) == 0, "channel must be divisible by 2*groups"
    half = c // 2
    hw = h * w

    # Pure reshape (no data movement): channel -> (g, k) with g the shuffle half.
    x4 = x.reshape(b, 2, half, hw)
    prm = _row_params(params, c, groups)              # (2, half, 8)

    if block_k is None:
        # Biggest k-band keeping the x block around ~2 MiB (Pallas double-buffers it).
        bk = max(1, (2 * 1024 * 1024) // max(1, 2 * hw * 4))
        block_k = min(half, max(8, (bk // 8) * 8))
    block_k = min(block_k, half)
    assert block_k == half or block_k % 8 == 0
    grid = (b, pl.cdiv(half, block_k))

    # VMEM budget guard for very large spatial maps (per-step x+out+prm, double-buffered).
    est = 2 * (2 * block_k * hw * 4 + block_k * 2 * hw * 4 + 2 * block_k * 8 * 4) + (1 << 20)
    cp_kwargs = dict(dimension_semantics=("parallel", "parallel"))
    if est > 16 * 1024 * 1024:
        cp_kwargs["vmem_limit_bytes"] = min(est + (4 << 20), 60 * 1024 * 1024)

    kern = functools.partial(_sa_kernel, inv_hw=1.0 / hw, eps=1e-5, hw=hw)
    out3 = pl.pallas_call(
        kern,
        out_shape=jax.ShapeDtypeStruct((b, half, 2 * hw), jnp.float32),
        grid_spec=pltpu.PrefetchScalarGridSpec(
            num_scalar_prefetch=0,
            grid=grid,
            in_specs=[
                pl.BlockSpec((None, 2, block_k, hw), lambda i, k: (i, 0, k, 0)),
                pl.BlockSpec((2, block_k, 8), lambda i, k: (0, k, 0)),
            ],
            out_specs=pl.BlockSpec((None, block_k, 2 * hw), lambda i, k: (i, k, 0)),
        ),
        compiler_params=pltpu.CompilerParams(**cp_kwargs),
    )(x4, prm)

    # (B, half, 2*HW) -> (B, C, H, W): row-major flatten gives channel = 2k+g, i.e. the
    # channel_shuffle(·, 2) of the pre-shuffle concat — a free reshape, no data movement.
    return out3.reshape(b, c, h, w)


# ---------------------------- deterministic parameters ----------------------------

def init_params(key, channel, groups):
    # PyTorch defaults (cweight=0, cbias=1, sweight=0, sbias=1, gn.weight=1, gn.bias=0)
    # would make every gate a constant sigmoid(1); randomise so the self-test exercises
    # non-trivial gates on both branches.
    half = channel // (2 * groups)
    ks = iter(jax.random.split(key, 6))
    p = {}
    p["cweight"] = 0.5 * jax.random.normal(next(ks), (1, half, 1, 1), jnp.float32)
    p["cbias"] = 1.0 + 0.3 * jax.random.normal(next(ks), (1, half, 1, 1), jnp.float32)
    p["sweight"] = 0.5 * jax.random.normal(next(ks), (1, half, 1, 1), jnp.float32)
    p["sbias"] = 1.0 + 0.3 * jax.random.normal(next(ks), (1, half, 1, 1), jnp.float32)
    p["gn_weight"] = jax.random.uniform(next(ks), (half,), jnp.float32, 0.5, 1.5)
    p["gn_bias"] = 0.2 * jax.random.normal(next(ks), (half,), jnp.float32)
    return p


# ---------------------------- pure-JAX reference ----------------------------

def ref_forward(x_nchw, p, groups):
    x = x_nchw.astype(jnp.float32)
    b, c, h, w = x.shape
    cg = c // groups
    half = cg // 2
    xg = x.reshape(b * groups, cg, h, w)
    x0, x1 = xg[:, :half], xg[:, half:]

    # channel-attention branch
    xn = jnp.mean(x0, axis=(2, 3), keepdims=True)
    xn = p["cweight"] * xn + p["cbias"]
    xn = x0 * jax.nn.sigmoid(xn)

    # spatial-attention branch (GroupNorm with one channel per group)
    mu = jnp.mean(x1, axis=(2, 3), keepdims=True)
    var = jnp.mean((x1 - mu) ** 2, axis=(2, 3), keepdims=True)
    xs = (x1 - mu) / jnp.sqrt(var + 1e-5)
    xs = p["gn_weight"].reshape(1, half, 1, 1) * xs + p["gn_bias"].reshape(1, half, 1, 1)
    xs = p["sweight"] * xs + p["sbias"]
    xs = x1 * jax.nn.sigmoid(xs)

    out = jnp.concatenate([xn, xs], axis=1).reshape(b, c, h, w)
    # channel_shuffle(out, 2)
    out = out.reshape(b, 2, c // 2, h, w).transpose(0, 2, 1, 3, 4).reshape(b, c, h, w)
    return out


if __name__ == "__main__":
    key = jax.random.PRNGKey(0)
    k_x, k_p = jax.random.split(key)

    B, C, G, H, W = 2, 64, 8, 16, 16                 # channel // (2*groups) = 4
    x = jax.random.normal(k_x, (B, C, H, W), jnp.float32)   # NCHW, like PyTorch
    params = init_params(k_p, C, G)

    # block_k=8 with half=32 -> grid (2, 4), exercising the grid / index maps / pipeline.
    fwd = jax.jit(functools.partial(sa_layer_forward, groups=G, block_k=8))
    out = fwd(x, params)
    jax.block_until_ready(out)

    ref = ref_forward(x, params, G)
    np.testing.assert_allclose(np.asarray(out), np.asarray(ref), rtol=1e-3, atol=1e-3)
    assert out.shape == (B, C, H, W)

    print("KERNEL_OK")
</pallas_src>

<mosaic_0001>
module attributes {stable_mosaic.version = 11 : i64} {
  func.func @_sa_kernel(%arg0: i32, %arg1: i32, %arg2: memref<1x2x8x256xf32, #tpu.memory_space<vmem>>, %arg3: memref<2x8x8xf32, #tpu.memory_space<vmem>>, %arg4: memref<1x8x512xf32, #tpu.memory_space<vmem>>) attributes {dimension_semantics = [#tpu.dimension_semantics<parallel>, #tpu.dimension_semantics<parallel>], iteration_bounds = array<i64: 2, 4>, scalar_prefetch = 0 : i64, scratch_operands = 0 : i64, tpu.core_type = #tpu.core_type<tc>, window_params = [{transform_indices = @transform_0, window_bounds = array<i64: 1, 2, 8, 256>}, {transform_indices = @transform_1, window_bounds = array<i64: 2, 8, 8>}, {transform_indices = @transform_2, window_bounds = array<i64: 1, 8, 512>}]} {
    %c0 = arith.constant 0 : index
    %c0_0 = arith.constant 0 : index
    %c0_1 = arith.constant 0 : index
    %c0_2 = arith.constant 0 : index
    %0 = vector.load %arg2[%c0, %c0_0, %c0_1, %c0_2] : memref<1x2x8x256xf32, #tpu.memory_space<vmem>>, vector<1x2x8x256xf32>
    %1 = vector.shape_cast %0 : vector<1x2x8x256xf32> to vector<2x8x256xf32>
    %c0_3 = arith.constant 0 : index
    %c0_4 = arith.constant 0 : index
    %c0_5 = arith.constant 0 : index
    %2 = vector.load %arg3[%c0_3, %c0_4, %c0_5] : memref<2x8x8xf32, #tpu.memory_space<vmem>>, vector<2x8x8xf32>
    %3 = vector.extract_strided_slice %2 {offsets = [0, 0, 0], sizes = [2, 8, 1], strides = [1, 1, 1]} : vector<2x8x8xf32> to vector<2x8x1xf32>
    %4 = vector.extract_strided_slice %2 {offsets = [0, 0, 1], sizes = [2, 8, 1], strides = [1, 1, 1]} : vector<2x8x8xf32> to vector<2x8x1xf32>
    %5 = vector.extract_strided_slice %2 {offsets = [0, 0, 2], sizes = [2, 8, 1], strides = [1, 1, 1]} : vector<2x8x8xf32> to vector<2x8x1xf32>
    %6 = vector.extract_strided_slice %2 {offsets = [0, 0, 3], sizes = [2, 8, 1], strides = [1, 1, 1]} : vector<2x8x8xf32> to vector<2x8x1xf32>
    %cst = arith.constant dense<0.000000e+00> : vector<2x8xf32>
    %7 = vector.multi_reduction <add>, %1, %cst [2] : vector<2x8x256xf32> to vector<2x8xf32>
    %8 = vector.shape_cast %7 : vector<2x8xf32> to vector<2x8x1xf32>
    %cst_6 = arith.constant 3.906250e-03 : f32
    %9 = vector.broadcast %cst_6 : f32 to vector<2x8x1xf32>
    %10 = arith.mulf %8, %9 : vector<2x8x1xf32>
    %11 = arith.mulf %1, %1 : vector<2x8x256xf32>
    %cst_7 = arith.constant dense<0.000000e+00> : vector<2x8xf32>
    %12 = vector.multi_reduction <add>, %11, %cst_7 [2] : vector<2x8x256xf32> to vector<2x8xf32>
    %13 = vector.shape_cast %12 : vector<2x8xf32> to vector<2x8x1xf32>
    %cst_8 = arith.constant 3.906250e-03 : f32
    %14 = vector.broadcast %cst_8 : f32 to vector<2x8x1xf32>
    %15 = arith.mulf %13, %14 : vector<2x8x1xf32>
    %16 = arith.mulf %10, %10 : vector<2x8x1xf32>
    %17 = arith.subf %15, %16 : vector<2x8x1xf32>
    %cst_9 = arith.constant 0.000000e+00 : f32
    %18 = vector.broadcast %cst_9 : f32 to vector<2x8x1xf32>
    %19 = arith.maximumf %17, %18 : vector<2x8x1xf32>
    %cst_10 = arith.constant 9.99999974E-6 : f32
    %20 = vector.broadcast %cst_10 : f32 to vector<2x8x1xf32>
    %21 = arith.addf %19, %20 : vector<2x8x1xf32>
    %22 = math.rsqrt %21 : vector<2x8x1xf32>
    %23 = arith.mulf %5, %22 : vector<2x8x1xf32>
    %24 = arith.addf %6, %4 : vector<2x8x1xf32>
    %25 = arith.subf %3, %23 : vector<2x8x1xf32>
    %26 = arith.mulf %25, %10 : vector<2x8x1xf32>
    %27 = arith.addf %24, %26 : vector<2x8x1xf32>
    %28 = vector.broadcast %23 : vector<2x8x1xf32> to vector<2x8x256xf32>
    %29 = arith.mulf %28, %1 : vector<2x8x256xf32>
    %30 = vector.broadcast %27 : vector<2x8x1xf32> to vector<2x8x256xf32>
    %31 = arith.addf %29, %30 : vector<2x8x256xf32>
    %cst_11 = arith.constant 0.000000e+00 : f32
    %32 = vector.broadcast %cst_11 : f32 to vector<2x8x256xf32>
    %33 = arith.subf %32, %31 : vector<2x8x256xf32>
    %34 = math.exp %33 : vector<2x8x256xf32>
    %cst_12 = arith.constant 1.000000e+00 : f32
    %35 = vector.broadcast %cst_12 : f32 to vector<2x8x256xf32>
    %36 = arith.addf %35, %34 : vector<2x8x256xf32>
    %cst_13 = arith.constant 1.000000e+00 : f32
    %37 = vector.broadcast %cst_13 : f32 to vector<2x8x256xf32>
    %38 = arith.divf %37, %36 : vector<2x8x256xf32>
    %39 = arith.mulf %1, %38 : vector<2x8x256xf32>
    %40 = vector.extract_strided_slice %39 {offsets = [0, 0, 0], sizes = [1, 8, 256], strides = [1, 1, 1]} : vector<2x8x256xf32> to vector<1x8x256xf32>
    %41 = vector.shape_cast %40 : vector<1x8x256xf32> to vector<8x256xf32>
    %c0_14 = arith.constant 0 : index
    %c0_15 = arith.constant 0 : index
    %c0_16 = arith.constant 0 : index
    %42 = vector.load %arg4[%c0_14, %c0_15, %c0_16] : memref<1x8x512xf32, #tpu.memory_space<vmem>>, vector<1x8x256xf32>
    %43 = vector.shape_cast %42 : vector<1x8x256xf32> to vector<8x256xf32>
    %44 = vector.shape_cast %41 : vector<8x256xf32> to vector<1x8x256xf32>
    tpu.vector_store %arg4[%c0_14, %c0_15, %c0_16], %44 {strides = array<i32>} : memref<1x8x512xf32, #tpu.memory_space<vmem>>, vector<1x8x256xf32>,
    %45 = vector.extract_strided_slice %39 {offsets = [1, 0, 0], sizes = [1, 8, 256], strides = [1, 1, 1]} : vector<2x8x256xf32> to vector<1x8x256xf32>
    %46 = vector.shape_cast %45 : vector<1x8x256xf32> to vector<8x256xf32>
    %c0_17 = arith.constant 0 : index
    %c0_18 = arith.constant 0 : index
    %c256 = arith.constant 256 : index
    %47 = vector.load %arg4[%c0_17, %c0_18, %c256] : memref<1x8x512xf32, #tpu.memory_space<vmem>>, vector<1x8x256xf32>
    %48 = vector.shape_cast %47 : vector<1x8x256xf32> to vector<8x256xf32>
    %49 = vector.shape_cast %46 : vector<8x256xf32> to vector<1x8x256xf32>
    tpu.vector_store %arg4[%c0_17, %c0_18, %c256], %49 {strides = array<i32>} : memref<1x8x512xf32, #tpu.memory_space<vmem>>, vector<1x8x256xf32>,
    return
  }
  func.func @transform_0(%arg0: i32, %arg1: i32) -> (i32, i32, i32, i32) {
    %c0_i32 = arith.constant 0 : i32
    %c0_i32_0 = arith.constant 0 : i32
    %c0_i32_1 = arith.constant 0 : i32
    return %arg0, %c0_i32, %arg1, %c0_i32_0 : i32, i32, i32, i32
  }
  func.func @transform_1(%arg0: i32, %arg1: i32) -> (i32, i32, i32) {
    %c0_i32 = arith.constant 0 : i32
    %c0_i32_0 = arith.constant 0 : i32
    %c0_i32_1 = arith.constant 0 : i32
    return %c0_i32, %arg1, %c0_i32_0 : i32, i32, i32
  }
  func.func @transform_2(%arg0: i32, %arg1: i32) -> (i32, i32, i32) {
    %c0_i32 = arith.constant 0 : i32
    %c0_i32_0 = arith.constant 0 : i32
    return %arg0, %arg1, %c0_i32 : i32, i32, i32
  }
}

</mosaic_0001>

<llo_original>
// kernel: sa_layer_forward.1
$region0: #{sa_layer_forward.1}
  #allocation0 [shape = 'u32[]', space=smem, size = 0x4, offset = 0x4, fixed_abs, tag = 'smem constant byte address 0x4 - core index']
  #allocation1 [shape = 'u32[144,128]{1,0:T(1,128)}', space=vmem, size = 0x12000, scoped, tag = 'internal scratch']
  %s0 = inlined_call_operand.vmem [shape: f32[2,2,32,256], index: 0, kind: input, shape index: {}]
  %s1 = inlined_call_operand.vmem [shape: f32[2,32,8], index: 1, kind: input, shape index: {}]
  %s2 = inlined_call_operand.vmem [shape: f32[2,32,512], index: 2, kind: output, shape index: {}]
  %s3 = sld [smem:[#allocation0]]
  $region102: #{sa_layer_forward.1} parent=0
    _
  %s5 = ssub.s32 1, %s3
  %s6 = scalar_select 0, %s5, %s3
  $region1: #{sa_layer_forward.1} parent=0
    #allocation2 [shape = 'u8[32768]{0}', space=vmem, size = 0x8000, scoped, tag = 'input window, operand 0']
    #allocation3 [shape = 'u8[16384]{0}', space=vmem, size = 0x4000, scoped, tag = 'input window, operand 1']
    loop: start=0, step=1, limit=10
    $region2: #{sa_layer_forward.1} parent=1 // loop_pre_header
      _
    $region3: #{sa_layer_forward.1} parent=1 // loop_header
      %s8 = sphi 0, %s12
      %p9 = scmp.ge.s32.totalorder %s8, 10
      %s15 = sphi 0, %s27
      %s16 = sphi 0, %s23
      %s17 = sphi 0, %s15
      %s18 = sphi 0, %s16
      %s19 = sphi 0, %s17
      %s20 = sphi 0, %s18
      %s32 = sphi 0, %s34
      %s35 = sphi 0, %s32
      %s36 = sphi 0, %s35
      %s52 = sphi 0, %s36
      %s58 = sphi 0, %s60
      %s61 = sphi 0, %s58
      %s62 = sphi 0, %s61
      %s78 = sphi 0, %s62
      %s86 = sphi 0, %s88
      %s89 = sphi 0, %s86
      %s90 = sphi 0, %s89
      %s106 = sphi 0, %s90
    $region4: #{sa_layer_forward.1} parent=1 // loop_header_branch
      %11 = sbr.rel (%p9) target = $region8
    $region5: #{sa_layer_forward.1} parent=1 // loop_body
      %s13 = ssub.s32 %s8, 1
      %s14 = ssub.s32 %s8, 2
      %s21 = sadd.s32 1, %s16
      %p22 = scmp.ge.s32.totalorder %s21, 4
      %s23 = scalar_select %p22, 0, %s21
      %s24 = sadd.s32 1, %s15
      %s25 = scalar_select %p22, %s24, %s15
      %p26 = scmp.ge.s32.totalorder %s25, 2
      %s27 = scalar_select %p26, 0, %s25
      %s28 = ssub.s32 %s15, %s27
      %s29 = ssub.s32 %s16, %s23
      %s30 = sor.u32 %s28, %s29
      %p31 = scmp.eq.s32.totalorder %s30, 0
      %s33 = sadd.s32 %s32, 1
      %s34 = scalar_select %p31, %s32, %s33
      %p37 = pneg %p31
      %p38 = scmp.eq.s32.totalorder %s8, 7
      %p39 = por %p37, %p38
      %p40 = scmp.ne.s32.totalorder %s32, %s35
      %p41 = scmp.eq.s32.totalorder %s8, 0
      %p42 = por %p40, %p41
      %p43 = scmp.ne.s32.totalorder %s32, %s35
      %p44 = scmp.eq.s32.totalorder %s13, 7
      %p45 = por %p43, %p44
      %p46 = scmp.ne.s32.totalorder %s35, %s36
      %p47 = scmp.eq.s32.totalorder %s13, 0
      %p48 = por %p46, %p47
      %p49 = scmp.ne.s32.totalorder %s35, %s36
      %p50 = scmp.eq.s32.totalorder %s14, 7
      %p51 = por %p49, %p50
      %p53 = scmp.ne.s32.totalorder %s36, %s52
      %p54 = scmp.eq.s32.totalorder %s14, 0
      %p55 = por %p53, %p54
      %s56 = ssub.s32 %s16, %s23
      %p57 = scmp.eq.s32.totalorder %s56, 0
      %s59 = sadd.s32 %s58, 1
      %s60 = scalar_select %p57, %s58, %s59
      %p63 = pneg %p57
      %p64 = scmp.eq.s32.totalorder %s8, 7
      %p65 = por %p63, %p64
      %p66 = scmp.ne.s32.totalorder %s58, %s61
      %p67 = scmp.eq.s32.totalorder %s8, 0
      %p68 = por %p66, %p67
      %p69 = scmp.ne.s32.totalorder %s58, %s61
      %p70 = scmp.eq.s32.totalorder %s13, 7
      %p71 = por %p69, %p70
      %p72 = scmp.ne.s32.totalorder %s61, %s62
      %p73 = scmp.eq.s32.totalorder %s13, 0
      %p74 = por %p72, %p73
      %p75 = scmp.ne.s32.totalorder %s61, %s62
      %p76 = scmp.eq.s32.totalorder %s14, 7
      %p77 = por %p75, %p76
      %p79 = scmp.ne.s32.totalorder %s62, %s78
      %p80 = scmp.eq.s32.totalorder %s14, 0
      %p81 = por %p79, %p80
      %s82 = ssub.s32 %s15, %s27
      %s83 = ssub.s32 %s16, %s23
      %s84 = sor.u32 %s82, %s83
      %p85 = scmp.eq.s32.totalorder %s84, 0
      %s87 = sadd.s32 %s86, 1
      %s88 = scalar_select %p85, %s86, %s87
      %p91 = pneg %p85
      %p92 = scmp.eq.s32.totalorder %s8, 7
      %p93 = por %p91, %p92
      %p94 = scmp.ne.s32.totalorder %s86, %s89
      %p95 = scmp.eq.s32.totalorder %s8, 0
      %p96 = por %p94, %p95
      %p97 = scmp.ne.s32.totalorder %s86, %s89
      %p98 = scmp.eq.s32.totalorder %s13, 7
      %p99 = por %p97, %p98
      %p100 = scmp.ne.s32.totalorder %s89, %s90
      %p101 = scmp.eq.s32.totalorder %s13, 0
      %p102 = por %p100, %p101
      %p103 = scmp.ne.s32.totalorder %s89, %s90
      %p104 = scmp.eq.s32.totalorder %s14, 7
      %p105 = por %p103, %p104
      %p107 = scmp.ne.s32.totalorder %s90, %s106
      %p108 = scmp.eq.s32.totalorder %s14, 0
      %p109 = por %p107, %p108
      %p110 = scmp.le.s32.totalorder 1, %s8
      %p111 = scmp.lt.s32.totalorder %s8, 9
      %p112 = pnand %p110, %p111
      %p113 = pneg %p112
      // Predicated region
      $region9: #{sa_layer_forward.1} parent=5 // pred_check
        _
      $region10: #{sa_layer_forward.1} parent=5 // pred_check_branch
        %115 = sbr.rel (%p112) target = $region12
      $region11: #{sa_layer_forward.1} parent=5 // pred_region
        %s116 = ssub.s32 %s8, 1
      $region12: #{sa_layer_forward.1} parent=5 // pred_fallthru
        _
      %p117 = scmp.lt.s32.totalorder %s8, 8
      // Predicated region
      $region13: #{sa_layer_forward.1} parent=5 // pred_check
        %p118 = pneg %p117
      $region14: #{sa_layer_forward.1} parent=5 // pred_check_branch
        %120 = sbr.rel (%p118) target = $region16
      $region15: #{sa_layer_forward.1} parent=5 // pred_region
        // Predicated region
        $region17: #{sa_layer_forward.1} parent=15 // pred_check
          %p121 = pneg %p42
        $region18: #{sa_layer_forward.1} parent=15 // pred_check_branch
          %123 = sbr.rel (%p121) target = $region20
        $region19: #{sa_layer_forward.1} parent=15 // pred_region
          %s124 = sand.u32 %s32, 1
          %s125 = sand.u32 %s32, 1
          %s126 = smul.addr %s125, 32
          %s127 = scalar_lea.vmem [#allocation2], %s126
          %s128 = smul.addr %s16, 2
          %s129 = smul.addr %s15, 16
          %s130 = sadd.s32 %s128, %s129
          %s131 = smul.addr %s130, 8
          %s132 = scalar_lea.vmem %s0, %s131
          // Predicated region
          $region21: #{sa_layer_forward.1} parent=19 // pred_check
            _
          $region22: #{sa_layer_forward.1} parent=19 // pred_check_branch
            %134 = sbr.rel (0) target = $region24
          $region23: #{sa_layer_forward.1} parent=19 // pred_region
            // Predicated region
            $region25: #{sa_layer_forward.1} parent=23 // pred_check
              _
            $region26: #{sa_layer_forward.1} parent=23 // pred_check_branch
              %136 = sbr.rel (0) target = $region28
            $region27: #{sa_layer_forward.1} parent=23 // pred_region
              loop: start=0, step=1, limit=1
              $region29: #{sa_layer_forward.1} parent=27 // loop_pre_header
                _
              $region30: #{sa_layer_forward.1} parent=27 // loop_header
                %s138 = sphi 0, %s142
                %p139 = scmp.ge.s32.totalorder %s138, 1
                %s143 = sphi %s132, %s132
                %s144 = sphi %s127, %s127
              $region31: #{sa_layer_forward.1} parent=27 // loop_header_branch
                %141 = sbr.rel (%p139) target = $region35
              $region32: #{sa_layer_forward.1} parent=27 // loop_body
                %v145 = vld [vmem:[%s143] sm:$0xff]
                %146 = vst [vmem:[%s144] sm:$0xff] %v145
                %v147 = vld [vmem:[%s143 + $0x8] sm:$0xff]
                %148 = vst [vmem:[%s144 + $0x8] sm:$0xff] %v147
                %v149 = vld [vmem:[%s143 + $0x40] sm:$0xff]
                %150 = vst [vmem:[%s144 + $0x10] sm:$0xff] %v149
                %v151 = vld [vmem:[%s143 + $0x48] sm:$0xff]
                %152 = vst [vmem:[%s144 + $0x18] sm:$0xff] %v151
              $region33: #{sa_layer_forward.1} parent=27 // loop_footer
                %s142 = sadd.s32 1, %s138
              $region34: #{sa_layer_forward.1} parent=27 // loop_footer_branch
                %137 = sbr.rel target = $region30
              $region35: #{sa_layer_forward.1} parent=27 // loop_exit
                _
            $region28: #{sa_layer_forward.1} parent=23 // pred_fallthru
              _
            // Predicated region
            $region36: #{sa_layer_forward.1} parent=23 // pred_check
              _
            $region37: #{sa_layer_forward.1} parent=23 // pred_check_branch
              %154 = sbr.rel target = $region39
            $region38: #{sa_layer_forward.1} parent=23 // pred_region
              _
            $region39: #{sa_layer_forward.1} parent=23 // pred_fallthru
              _
          $region24: #{sa_layer_forward.1} parent=19 // pred_fallthru
            _
          %155 = vnop
        $region20: #{sa_layer_forward.1} parent=15 // pred_fallthru
          _
        // Predicated region
        $region40: #{sa_layer_forward.1} parent=15 // pred_check
          %p156 = pneg %p68
        $region41: #{sa_layer_forward.1} parent=15 // pred_check_branch
          %158 = sbr.rel (%p156) target = $region43
        $region42: #{sa_layer_forward.1} parent=15 // pred_region
          %s159 = sand.u32 %s58, 1
          %s160 = sand.u32 %s58, 1
          %s161 = smul.addr %s160, 16
          %s162 = scalar_lea.vmem [#allocation3], %s161
          %s163 = smul.addr %s16, 8
          %s164 = scalar_lea.vmem %s1, %s163
          // Predicated region
          $region44: #{sa_layer_forward.1} parent=42 // pred_check
            _
          $region45: #{sa_layer_forward.1} parent=42 // pred_check_branch
            %166 = sbr.rel (0) target = $region47
          $region46: #{sa_layer_forward.1} parent=42 // pred_region
            // Predicated region
            $region48: #{sa_layer_forward.1} parent=46 // pred_check
              _
            $region49: #{sa_layer_forward.1} parent=46 // pred_check_branch
              %168 = sbr.rel (0) target = $region51
            $region50: #{sa_layer_forward.1} parent=46 // pred_region
              // Predicated region
              $region63: #{sa_layer_forward.1} parent=50 // pred_check
                _
              $region64: #{sa_layer_forward.1} parent=50 // pred_check_branch
                %186 = sbr.rel (0) target = $region66
              $region65: #{sa_layer_forward.1} parent=50 // pred_region
                loop: start=0, step=1, limit=1
                $region67: #{sa_layer_forward.1} parent=65 // loop_pre_header
                  _
                $region68: #{sa_layer_forward.1} parent=65 // loop_header
                  %s188 = sphi 0, %s192
                  %p189 = scmp.ge.s32.totalorder %s188, 1
                  %s193 = sphi %s164, %s164
                  %s194 = sphi %s162, %s162
                $region69: #{sa_layer_forward.1} parent=65 // loop_header_branch
                  %191 = sbr.rel (%p189) target = $region73
                $region70: #{sa_layer_forward.1} parent=65 // loop_body
                  %v195 = vld [vmem:[%s193] sm:$0xff]
                  %196 = vst [vmem:[%s194] sm:$0xff] %v195
                  %v197 = vld [vmem:[%s193 + $0x20] sm:$0xff]
                  %198 = vst [vmem:[%s194 + $0x8] sm:$0xff] %v197
                $region71: #{sa_layer_forward.1} parent=65 // loop_footer
                  %s192 = sadd.s32 1, %s188
                $region72: #{sa_layer_forward.1} parent=65 // loop_footer_branch
                  %187 = sbr.rel target = $region68
                $region73: #{sa_layer_forward.1} parent=65 // loop_exit
                  _
              $region66: #{sa_layer_forward.1} parent=50 // pred_fallthru
                _
              // Predicated region
              $region74: #{sa_layer_forward.1} parent=50 // pred_check
                _
              $region75: #{sa_layer_forward.1} parent=50 // pred_check_branch
                %200 = sbr.rel target = $region77
              $region76: #{sa_layer_forward.1} parent=50 // pred_region
                _
              $region77: #{sa_layer_forward.1} parent=50 // pred_fallthru
                _
            $region51: #{sa_layer_forward.1} parent=46 // pred_fallthru
              _
            // Predicated region
            $region52: #{sa_layer_forward.1} parent=46 // pred_check
              _
            $region53: #{sa_layer_forward.1} parent=46 // pred_check_branch
              %170 = sbr.rel target = $region55
            $region54: #{sa_layer_forward.1} parent=46 // pred_region
              %s172 = ssub.s32 256, 1
              loop: start=0, step=1, limit=1
              $region56: #{sa_layer_forward.1} parent=54 // loop_pre_header
                _
              $region57: #{sa_layer_forward.1} parent=54 // loop_header
                %s174 = sphi 0, %s178
                %p175 = scmp.ge.s32.totalorder %s174, 1
                %s179 = sphi %s164, %s164
                %s180 = sphi %s162, %s162
              $region58: #{sa_layer_forward.1} parent=54 // loop_header_branch
                %177 = sbr.rel (%p175) target = $region62
              $region59: #{sa_layer_forward.1} parent=54 // loop_body
                %v181 = vld [vmem:[%s179] sm:%s172]
                %182 = vst [vmem:[%s180] sm:%s172] %v181
                %v183 = vld [vmem:[%s179 + $0x20] sm:%s172]
                %184 = vst [vmem:[%s180 + $0x8] sm:%s172] %v183
              $region60: #{sa_layer_forward.1} parent=54 // loop_footer
                %s178 = sadd.s32 1, %s174
              $region61: #{sa_layer_forward.1} parent=54 // loop_footer_branch
                %173 = sbr.rel target = $region57
              $region62: #{sa_layer_forward.1} parent=54 // loop_exit
                _
            $region55: #{sa_layer_forward.1} parent=46 // pred_fallthru
              _
          $region47: #{sa_layer_forward.1} parent=42 // pred_fallthru
            _
          %201 = vnop
        $region43: #{sa_layer_forward.1} parent=15 // pred_fallthru
          _
      $region16: #{sa_layer_forward.1} parent=5 // pred_fallthru
        _
      %p202 = scmp.le.s32.totalorder 1, %s8
      %p203 = scmp.lt.s32.totalorder %s8, 9
      %p204 = pnand %p202, %p203
      %p205 = pneg %p204
      // Predicated region
      $region78: #{sa_layer_forward.1} parent=5 // pred_check
        _
      $region79: #{sa_layer_forward.1} parent=5 // pred_check_branch
        %207 = sbr.rel (%p204) target = $region81
      $region80: #{sa_layer_forward.1} parent=5 // pred_region
        %s208 = ssub.s32 %s8, 1
        %s209 = sand.u32 %s35, 1
        %s210 = sand.u32 %s35, 1
        %s211 = smul.addr %s210, 32
        %s212 = scalar_lea.vmem [#allocation2], %s211
        // Predicated region
        $region82: #{sa_layer_forward.1} parent=80 // pred_check
          %p213 = pneg %p48
        $region83: #{sa_layer_forward.1} parent=80 // pred_check_branch
          %215 = sbr.rel (%p213) target = $region85
        $region84: #{sa_layer_forward.1} parent=80 // pred_region
          _
        $region85: #{sa_layer_forward.1} parent=80 // pred_fallthru
          _
        %s216 = sand.u32 %s61, 1
        %s217 = sand.u32 %s61, 1
        %s218 = smul.addr %s217, 16
        %s219 = scalar_lea.vmem [#allocation3], %s218
        // Predicated region
        $region86: #{sa_layer_forward.1} parent=80 // pred_check
          %p220 = pneg %p74
        $region87: #{sa_layer_forward.1} parent=80 // pred_check_branch
          %222 = sbr.rel (%p220) target = $region89
        $region88: #{sa_layer_forward.1} parent=80 // pred_region
          _
        $region89: #{sa_layer_forward.1} parent=80 // pred_fallthru
          _
        %s223 = sand.u32 %s35, 1
        %s224 = sand.u32 %s35, 1
        %s225 = smul.addr %s224, 32
        %s226 = scalar_lea.vmem [#allocation2], %s225
        %p227 = pneg %p48
        %p228 = pneg %p45
        %s229 = sand.u32 %s61, 1
        %s230 = sand.u32 %s61, 1
        %s231 = smul.addr %s230, 16
        %s232 = scalar_lea.vmem [#allocation3], %s231
        %p233 = pneg %p74
        %p234 = pneg %p71
        %p235 = pneg %p102
        %p236 = pneg %p99
        %p237 = scmp.lt.s32.totalorder %s17, 1
        %s238 = scalar_select %p237, %s17, 1
        %p239 = scmp.lt.s32.totalorder %s18, 3
        %s240 = scalar_select %p239, %s18, 3
        %s241 = smul.addr %s240, 4
        %s242 = smul.addr %s238, 16
        %s243 = sadd.s32 %s241, %s242
        %s244 = smul.addr %s243, 8
        %s245 = scalar_lea.vmem %s2, %s244
        %p246 = scmp.lt.s32.totalorder %s17, 1
        %s247 = scalar_select %p246, %s17, 1
        %p248 = scmp.lt.s32.totalorder %s18, 3
        %s249 = scalar_select %p248, %s18, 3
        %s250 = smul.addr %s249, 4
        %s251 = smul.addr %s247, 16
        %s252 = sadd.s32 %s250, %s251
        %s253 = smul.addr %s252, 8
        %s254 = scalar_lea.vmem %s2, %s253
        %v255 = vld [vmem:[%s212] sm:$0xff]
        %v256 = vld [vmem:[%s212 + $0x8] sm:$0xff]
        %v257 = vld [vmem:[%s212 + $0x10] sm:$0xff]
        %v258 = vld [vmem:[%s212 + $0x18] sm:$0xff]
        %v259 = vld [vmem:[%s219] sm:$0xff]
        %v260 = vld [vmem:[%s219 + $0x8] sm:$0xff]
        %v261 = vadd.f32 %v255, %v256
        %262 = vadd.xlane.f32.xlu0 %v261
        %v263 = vpop.xlane.xlu0 %262
        %v264 = vadd.f32 %v257, %v258
        %265 = vadd.xlane.f32.xlu0 %v264
        %v266 = vpop.xlane.xlu0 %265
        %v267 = vmul.f32 %v263, 0.00390625
        %v268 = vmul.f32 %v266, 0.00390625
        %v269 = vmul.f32 %v255, %v255
        %v270 = vmul.f32 %v256, %v256
        %v271 = vmul.f32 %v257, %v257
        %v272 = vmul.f32 %v258, %v258
        %v273 = vadd.f32 %v269, %v270
        %274 = vadd.xlane.f32.xlu0 %v273
        %v275 = vpop.xlane.xlu0 %274
        %v276 = vadd.f32 %v271, %v272
        %277 = vadd.xlane.f32.xlu0 %v276
        %v278 = vpop.xlane.xlu0 %277
        %v279 = vmul.f32 %v275, 0.00390625
        %v280 = vmul.f32 %v278, 0.00390625
        %v281 = vmul.f32 %v267, %v267
        %v282 = vmul.f32 %v268, %v268
        %v283 = vsub.f32 %v279, %v281
        %v284 = vsub.f32 %v280, %v282
        %v285 = vmax.f32 %v283, 0.0
        %v286 = vmax.f32 %v284, 0.0
        %v287 = vadd.f32 %v285, 1e-05
        %v288 = vadd.f32 %v286, 1e-05
        %v289 = vrsqrt.pop %v287
        %v290 = vrsqrt.pop %v288
        %v291 = vmul.f32 %v259, %v289
        %v292 = vmul.f32 %v260, %v290
        %295 = vrot.lane.b32.xlu0 %v259, 2
        %v296 = vpop.permute.xlu0 %295
        %297 = vrot.lane.b32.xlu0 %v260, 2
        %v298 = vpop.permute.xlu0 %297
        %v301 = vadd.f32 %v259, %v296
        %v302 = vadd.f32 %v260, %v298
        %305 = vrot.lane.b32.xlu0 %v291, 126
        %v306 = vpop.permute.xlu0 %305
        %307 = vrot.lane.b32.xlu0 %v292, 126
        %v308 = vpop.permute.xlu0 %307
        %v311 = vsub.f32 %v259, %v306
        %v312 = vsub.f32 %v260, %v308
        %v313 = vmul.f32 %v311, %v267
        %v314 = vmul.f32 %v312, %v268
        %317 = vrot.lane.b32.xlu0 %v313, 3
        %v318 = vpop.permute.xlu0 %317
        %319 = vrot.lane.b32.xlu0 %v314, 3
        %v320 = vpop.permute.xlu0 %319
        %v323 = vadd.f32 %v301, %v318
        %v324 = vadd.f32 %v302, %v320
        %325 = vset.pattern.permute.xlu0 2
        %326 = vperm.xlu0 %325, %v291
        %v327 = vpop.permute.xlu0 %326
        %329 = vset.pattern.permute.xlu0 2
        %330 = vperm.xlu0 %329, %v292
        %v331 = vpop.permute.xlu0 %330
        %v333 = vmul.f32 %v327, %v255
        %v334 = vmul.f32 %v327, %v256
        %v335 = vmul.f32 %v331, %v257
        %v336 = vmul.f32 %v331, %v258
        %338 = vset.pattern.permute.xlu0 3
        %339 = vperm.xlu0 %338, %v323
        %v340 = vpop.permute.xlu0 %339
        %343 = vset.pattern.permute.xlu0 3
        %344 = vperm.xlu0 %343, %v324
        %v345 = vpop.permute.xlu0 %344
        %v347 = vadd.f32 %v333, %v340
        %v348 = vadd.f32 %v334, %v340
        %v349 = vadd.f32 %v335, %v345
        %v350 = vadd.f32 %v336, %v345
        %v351 = vsub.f32 0.0, %v347
        %v352 = vsub.f32 0.0, %v348
        %v353 = vsub.f32 0.0, %v349
        %v354 = vsub.f32 0.0, %v350
        %v355 = vmul.f32 %v351, 1.442695
        %v356 = vpow.pop %v355
        %v357 = vmul.f32 %v352, 1.442695
        %v358 = vpow.pop %v357
        %v359 = vmul.f32 %v353, 1.442695
        %v360 = vpow.pop %v359
        %v361 = vmul.f32 %v354, 1.442695
        %v362 = vpow.pop %v361
        %v363 = vadd.f32 %v356, 1.0
        %v364 = vadd.f32 %v358, 1.0
        %v365 = vadd.f32 %v360, 1.0
        %v366 = vadd.f32 %v362, 1.0
        %v367 = vrcp.pop %v363
        %v368 = vmul.f32 1.0, %v367
        %v369 = vrcp.pop %v364
        %v370 = vmul.f32 1.0, %v369
        %v371 = vrcp.pop %v365
        %v372 = vmul.f32 1.0, %v371
        %v373 = vrcp.pop %v366
        %v374 = vmul.f32 1.0, %v373
        %v375 = vmul.f32 %v255, %v368
        %v376 = vmul.f32 %v256, %v370
        %v377 = vmul.f32 %v257, %v372
        %v378 = vmul.f32 %v258, %v374
        %379 = vst [vmem:[%s254] sm:$0xff] %v375
        %380 = vst [vmem:[%s254 + $0x8] sm:$0xff] %v376
        %381 = vst [vmem:[%s254 + $0x10] sm:$0xff] %v377
        %382 = vst [vmem:[%s254 + $0x18] sm:$0xff] %v378
        %p383 = scmp.lt.s32.totalorder %s17, 1
        %s384 = scalar_select %p383, %s17, 1
        %p385 = scmp.lt.s32.totalorder %s18, 3
        %s386 = scalar_select %p385, %s18, 3
        %s387 = smul.addr %s386, 4
        %s388 = smul.addr %s384, 16
        %s389 = sadd.s32 %s387, %s388
        %s390 = smul.addr %s389, 8
        %s391 = scalar_lea.vmem %s2, %s390
        // Predicated region
        $region90: #{sa_layer_forward.1} parent=80 // pred_check
          %p392 = pneg %p99
        $region91: #{sa_layer_forward.1} parent=80 // pred_check_branch
          %394 = sbr.rel (%p392) target = $region93
        $region92: #{sa_layer_forward.1} parent=80 // pred_region
          _
        $region93: #{sa_layer_forward.1} parent=80 // pred_fallthru
          _
      $region81: #{sa_layer_forward.1} parent=5 // pred_fallthru
        _
      %p395 = scmp.le.s32.totalorder 2, %s8
      // Predicated region
      $region94: #{sa_layer_forward.1} parent=5 // pred_check
        %p396 = pneg %p395
      $region95: #{sa_layer_forward.1} parent=5 // pred_check_branch
        %398 = sbr.rel (%p396) target = $region97
      $region96: #{sa_layer_forward.1} parent=5 // pred_region
        %s399 = ssub.s32 %s8, 2
        // Predicated region
        $region98: #{sa_layer_forward.1} parent=96 // pred_check
          %p400 = pneg %p105
        $region99: #{sa_layer_forward.1} parent=96 // pred_check_branch
          %402 = sbr.rel (%p400) target = $region101
        $region100: #{sa_layer_forward.1} parent=96 // pred_region
          %p403 = scmp.lt.s32.totalorder %s19, 1
          %s404 = scalar_select %p403, %s19, 1
          %p405 = scmp.lt.s32.totalorder %s20, 3
          %s406 = scalar_select %p405, %s20, 3
          %s407 = smul.addr %s406, 4
          %s408 = smul.addr %s404, 16
          %s409 = sadd.s32 %s407, %s408
          %s410 = smul.addr %s409, 8
          %s411 = scalar_lea.vmem %s2, %s410
        $region101: #{sa_layer_forward.1} parent=96 // pred_fallthru
          _
      $region97: #{sa_layer_forward.1} parent=5 // pred_fallthru
        _
    $region6: #{sa_layer_forward.1} parent=1 // loop_footer
      %s12 = sadd.s32 1, %s8
    $region7: #{sa_layer_forward.1} parent=1 // loop_footer_branch
      %7 = sbr.rel target = $region3
    $region8: #{sa_layer_forward.1} parent=1 // loop_exit
      _

</llo_original>
